<compile_context>
chip_gen: v6e
topology: v6e:2x2x1
jax: 0.10.0
libtpu: 0.0.40
codegen_flags: <defaults>
</compile_context>

<pallas_src>
import jax
import jax.numpy as jnp
from jax import lax
from jax.experimental import pallas as pl
from jax.experimental.pallas import tpu as pltpu


def linear_kernel(x_ref, w_ref, b_ref, o_ref, acc_ref):
    # x_ref: (tm, tk), w_ref: (tn, tk)  (PyTorch (out, in) layout),
    # b_ref: (1, tn), o_ref: (tm, tn), acc_ref: (tm, tn) f32 scratch.
    @pl.when(pl.program_id(2) == 0)
    def _():
        acc_ref[...] = jnp.zeros_like(acc_ref)

    # x @ W^T without transposing W: contract dim 1 of x with dim 1 of W.
    acc_ref[...] += lax.dot_general(
        x_ref[...], w_ref[...],
        dimension_numbers=(((1,), (1,)), ((), ())),
        preferred_element_type=jnp.float32,
    )

    @pl.when(pl.program_id(2) == pl.num_programs(2) - 1)
    def _():
        o_ref[...] = (acc_ref[...] + b_ref[...]).astype(o_ref.dtype)


def _pick_tile(dim, target):
    """Tile size: `target` if it evenly divides `dim`, else the full dim.

    Guarantees (8,128)-rule compliance (either 128/256-multiples or the full
    array extent) and exact grids without masking logic.
    """
    if dim <= target:
        return dim
    return target if dim % target == 0 else dim


def linear_norm(x, weight, bias, *, tm=128, tn=256, tk=256):
    """y = x @ weight^T + bias.

    x      : (B, H_in)  f32
    weight : (H_out, H_in)  -- PyTorch nn.Linear layout, NOT transposed here
    bias   : (H_out,)
    """
    B, H_in = x.shape
    H_out, H_in_w = weight.shape
    assert H_in_w == H_in

    tm = _pick_tile(B, tm)
    tn = _pick_tile(H_out, tn)
    tk = _pick_tile(H_in, tk)

    grid = (pl.cdiv(B, tm), pl.cdiv(H_out, tn), pl.cdiv(H_in, tk))
    b2d = bias.reshape(1, H_out)  # 2-D for TPU-friendly (sublane, lane) layout

    cost = pl.CostEstimate(
        flops=2 * B * H_out * H_in,
        transcendentals=0,
        bytes_accessed=4 * (B * H_in + H_out * H_in + H_out + B * H_out),
    )

    return pl.pallas_call(
        linear_kernel,
        out_shape=jax.ShapeDtypeStruct((B, H_out), x.dtype),
        grid=grid,
        in_specs=[
            pl.BlockSpec((tm, tk), lambda i, j, k: (i, k)),   # x
            pl.BlockSpec((tn, tk), lambda i, j, k: (j, k)),   # weight (out, in)
            pl.BlockSpec((1, tn), lambda i, j, k: (0, j)),    # bias
        ],
        out_specs=pl.BlockSpec((tm, tn), lambda i, j, k: (i, j)),
        scratch_shapes=[pltpu.VMEM((tm, tn), jnp.float32)],
        compiler_params=pltpu.CompilerParams(
            dimension_semantics=("parallel", "parallel", "arbitrary"),
        ),
        cost_estimate=cost,
    )(x, weight, b2d)


if __name__ == "__main__":
    # hp.embedder.lstm_hidden = 32, hp.embedder.emb_dim = 16 (small synthetic shapes)
    batch, lstm_hidden, emb_dim = 8, 32, 16

    key = jax.random.PRNGKey(0)
    kx, kw, kb = jax.random.split(key, 3)

    x = jax.random.normal(kx, (batch, lstm_hidden), dtype=jnp.float32)
    # Deterministic init mimicking nn.Linear default: U(-1/sqrt(fan_in), 1/sqrt(fan_in))
    bound = 1.0 / (lstm_hidden ** 0.5)
    weight = jax.random.uniform(kw, (emb_dim, lstm_hidden), jnp.float32, -bound, bound)
    bias = jax.random.uniform(kb, (emb_dim,), jnp.float32, -bound, bound)

    out = linear_norm(x, weight, bias)
    jax.block_until_ready(out)

    # Reference check against plain JAX
    ref = x @ weight.T + bias
    assert out.shape == (batch, emb_dim)
    assert jnp.allclose(out, ref, atol=1e-5, rtol=1e-5)

    print("KERNEL_OK")
</pallas_src>

<mosaic_0001>
module attributes {stable_mosaic.version = 11 : i64} {
  func.func @linear_kernel(%arg0: i32, %arg1: i32, %arg2: i32, %arg3: memref<8x32xf32, #tpu.memory_space<vmem>>, %arg4: memref<16x32xf32, #tpu.memory_space<vmem>>, %arg5: memref<1x16xf32, #tpu.memory_space<vmem>>, %arg6: memref<8x16xf32, #tpu.memory_space<vmem>>, %arg7: memref<8x16xf32, #tpu.memory_space<vmem>>) attributes {dimension_semantics = [#tpu.dimension_semantics<parallel>, #tpu.dimension_semantics<parallel>, #tpu.dimension_semantics<arbitrary>], iteration_bounds = array<i64: 1, 1, 1>, scalar_prefetch = 0 : i64, scratch_operands = 1 : i64, tpu.core_type = #tpu.core_type<tc>, window_params = [{transform_indices = @transform_0, window_bounds = array<i64: 8, 32>}, {transform_indices = @transform_1, window_bounds = array<i64: 16, 32>}, {transform_indices = @transform_2, window_bounds = array<i64: 1, 16>}, {transform_indices = @transform_3, window_bounds = array<i64: 8, 16>}]} {
    %c0_i32 = arith.constant 0 : i32
    %0 = arith.cmpi eq, %arg2, %c0_i32 : i32
    %1 = arith.extui %0 : i1 to i32
    %c0_i32_0 = arith.constant 0 : i32
    %2 = arith.cmpi ne, %1, %c0_i32_0 : i32
    scf.if %2 {
      %cst_10 = arith.constant 0.000000e+00 : f32
      %12 = vector.broadcast %cst_10 : f32 to vector<8x16xf32>
      %c0_11 = arith.constant 0 : index
      %c0_12 = arith.constant 0 : index
      %13 = vector.load %arg7[%c0_11, %c0_12] : memref<8x16xf32, #tpu.memory_space<vmem>>, vector<8x16xf32>
      tpu.vector_store %arg7[%c0_11, %c0_12], %12 {strides = array<i32>} : memref<8x16xf32, #tpu.memory_space<vmem>>, vector<8x16xf32>,
    } else {
    }
    %c0 = arith.constant 0 : index
    %c0_1 = arith.constant 0 : index
    %3 = vector.load %arg7[%c0, %c0_1] : memref<8x16xf32, #tpu.memory_space<vmem>>, vector<8x16xf32>
    %c0_2 = arith.constant 0 : index
    %c0_3 = arith.constant 0 : index
    %4 = vector.load %arg3[%c0_2, %c0_3] : memref<8x32xf32, #tpu.memory_space<vmem>>, vector<8x32xf32>
    %c0_4 = arith.constant 0 : index
    %c0_5 = arith.constant 0 : index
    %5 = vector.load %arg4[%c0_4, %c0_5] : memref<16x32xf32, #tpu.memory_space<vmem>>, vector<16x32xf32>
    %cst = arith.constant dense<0.000000e+00> : vector<8x16xf32>
    %6 = tpu.matmul %4, %5, %cst {dimension_numbers = #tpu.dot_dimension_numbers<[1], [1], [0], [0], [0, 0, 1, 0], [], []>} : vector<8x32xf32>, vector<16x32xf32>, vector<8x16xf32> -> vector<8x16xf32>
    %7 = arith.addf %3, %6 : vector<8x16xf32>
    %c0_6 = arith.constant 0 : index
    %c0_7 = arith.constant 0 : index
    %8 = vector.load %arg7[%c0_6, %c0_7] : memref<8x16xf32, #tpu.memory_space<vmem>>, vector<8x16xf32>
    tpu.vector_store %arg7[%c0_6, %c0_7], %7 {strides = array<i32>} : memref<8x16xf32, #tpu.memory_space<vmem>>, vector<8x16xf32>,
    %c0_i32_8 = arith.constant 0 : i32
    %9 = arith.cmpi eq, %arg2, %c0_i32_8 : i32
    %10 = arith.extui %9 : i1 to i32
    %c0_i32_9 = arith.constant 0 : i32
    %11 = arith.cmpi ne, %10, %c0_i32_9 : i32
    scf.if %11 {
      %c0_10 = arith.constant 0 : index
      %c0_11 = arith.constant 0 : index
      %12 = vector.load %arg7[%c0_10, %c0_11] : memref<8x16xf32, #tpu.memory_space<vmem>>, vector<8x16xf32>
      %c0_12 = arith.constant 0 : index
      %c0_13 = arith.constant 0 : index
      %13 = vector.load %arg5[%c0_12, %c0_13] : memref<1x16xf32, #tpu.memory_space<vmem>>, vector<1x16xf32>
      %14 = vector.broadcast %13 : vector<1x16xf32> to vector<8x16xf32>
      %15 = arith.addf %12, %14 : vector<8x16xf32>
      %c0_14 = arith.constant 0 : index
      %c0_15 = arith.constant 0 : index
      %16 = vector.load %arg6[%c0_14, %c0_15] : memref<8x16xf32, #tpu.memory_space<vmem>>, vector<8x16xf32>
      tpu.vector_store %arg6[%c0_14, %c0_15], %15 {strides = array<i32>} : memref<8x16xf32, #tpu.memory_space<vmem>>, vector<8x16xf32>,
    } else {
    }
    return
  }
  func.func @transform_0(%arg0: i32, %arg1: i32, %arg2: i32) -> (i32, i32) {
    %c0_i32 = arith.constant 0 : i32
    return %arg0, %arg2 : i32, i32
  }
  func.func @transform_1(%arg0: i32, %arg1: i32, %arg2: i32) -> (i32, i32) {
    %c0_i32 = arith.constant 0 : i32
    return %arg1, %arg2 : i32, i32
  }
  func.func @transform_2(%arg0: i32, %arg1: i32, %arg2: i32) -> (i32, i32) {
    %c0_i32 = arith.constant 0 : i32
    %c0_i32_0 = arith.constant 0 : i32
    return %c0_i32, %arg1 : i32, i32
  }
  func.func @transform_3(%arg0: i32, %arg1: i32, %arg2: i32) -> (i32, i32) {
    %c0_i32 = arith.constant 0 : i32
    return %arg0, %arg1 : i32, i32
  }
}

</mosaic_0001>

<llo_original>
// kernel: tpu_custom_call.1
$region0: #{tpu_custom_call.1}
  #allocation0 [shape = 'u32[]', space=smem, size = 0x4, offset = 0x4, fixed_abs, tag = 'smem constant byte address 0x4 - core index']
  #allocation1 [shape = 'u32[144,128]{1,0:T(1,128)}', space=vmem, size = 0x12000, scoped, tag = 'internal scratch']
  #allocation2 [shape = 'f32[8,16]{1,0:T(8,128)}', space=vmem, size = 0x1000, scoped, tag = 'scratch operand']
  %s0 = inlined_call_operand.hbm [shape: f32[8,32], index: 0, kind: input, shape index: {}]
  %s1 = inlined_call_operand.hbm [shape: f32[16,32], index: 1, kind: input, shape index: {}]
  %s2 = inlined_call_operand.vmem [shape: f32[1,16], index: 2, kind: input, shape index: {}]
  %s3 = inlined_call_operand.hbm [shape: f32[8,16], index: 3, kind: output, shape index: {}]
  %s4 = sld [smem:[#allocation0]]
  $region38: #{tpu_custom_call.1} parent=0
    _
  %s6 = ssub.s32 1, %s4
  %s7 = scalar_select 0, %s6, %s4
  $region1: #{tpu_custom_call.1} parent=0
    #allocation3 [shape = 'u8[4096]{0}', space=vmem, size = 0x1000, scoped, tag = 'input window, operand 0, single buffered']
    #allocation4 [shape = 's32[1]{0}', space=sflag, size = 0x4, scoped, tag = 'scoped memory for tpu_custom_call.1']
    #allocation5 [shape = 's32[1]{0}', space=sflag, size = 0x4, scoped, tag = 'scoped memory for tpu_custom_call.1']
    #allocation6 [shape = 'u8[8192]{0}', space=vmem, size = 0x2000, scoped, tag = 'input window, operand 1, single buffered']
    #allocation7 [shape = 's32[1]{0}', space=sflag, size = 0x4, scoped, tag = 'scoped memory for tpu_custom_call.1']
    #allocation8 [shape = 'u8[4096]{0}', space=vmem, size = 0x1000, scoped, tag = 'output window, operand 0, single buffered']
    %8 = vsyncpa [#allocation4], 0
    %9 = vsyncpa [#allocation7], 0
    %10 = vsyncpa [#allocation5], 0
    // Predicated region
    $region2: #{tpu_custom_call.1} parent=1 // pred_check
      _
    $region3: #{tpu_custom_call.1} parent=1 // pred_check_branch
      %12 = sbr.rel (0) target = $region5
    $region4: #{tpu_custom_call.1} parent=1 // pred_region
      %s14 = ssub.s32 128, 128
      %15 = vsyncadd [#allocation4], %s14
      %s17 = sshll.u32 [#allocation3], 4
      %s18 = int_to_ptr.vmem [resolvable:$true] %s17
      %20 = dma.hbm_to_vmem [thread:$0]  %s0, 128, %s18, [#allocation4]
    $region5: #{tpu_custom_call.1} parent=1 // pred_fallthru
      _
    // Predicated region
    $region6: #{tpu_custom_call.1} parent=1 // pred_check
      _
    $region7: #{tpu_custom_call.1} parent=1 // pred_check_branch
      %22 = sbr.rel (0) target = $region9
    $region8: #{tpu_custom_call.1} parent=1 // pred_region
      %s24 = ssub.s32 256, 256
      %25 = vsyncadd [#allocation7], %s24
      %s26 = sshll.u32 [#allocation6], 4
      %s27 = int_to_ptr.vmem [resolvable:$true] %s26
      %32 = dma.hbm_to_vmem [thread:$0]  %s1, 256, %s27, [#allocation7], 128, 128, 8
    $region9: #{tpu_custom_call.1} parent=1 // pred_fallthru
      _
    // Predicated region
    $region10: #{tpu_custom_call.1} parent=1 // pred_check
      _
    $region11: #{tpu_custom_call.1} parent=1 // pred_check_branch
      %34 = sbr.rel (0) target = $region13
    $region12: #{tpu_custom_call.1} parent=1 // pred_region
      _
    $region13: #{tpu_custom_call.1} parent=1 // pred_fallthru
      _
    // Predicated region
    $region14: #{tpu_custom_call.1} parent=1 // pred_check
      _
    $region15: #{tpu_custom_call.1} parent=1 // pred_check_branch
      %36 = sbr.rel (0) target = $region17
    $region16: #{tpu_custom_call.1} parent=1 // pred_region
      %37 = dma.done [#allocation4], 128
    $region17: #{tpu_custom_call.1} parent=1 // pred_fallthru
      _
    // Predicated region
    $region18: #{tpu_custom_call.1} parent=1 // pred_check
      _
    $region19: #{tpu_custom_call.1} parent=1 // pred_check_branch
      %39 = sbr.rel (0) target = $region21
    $region20: #{tpu_custom_call.1} parent=1 // pred_region
      %40 = dma.done [#allocation7], 256
    $region21: #{tpu_custom_call.1} parent=1 // pred_fallthru
      _
    %p41 = scmp.eq.s32.totalorder 0, 0
    // Predicated region
    $region22: #{tpu_custom_call.1} parent=1 // pred_check
      %p42 = pneg %p41
    $region23: #{tpu_custom_call.1} parent=1 // pred_check_branch
      %44 = sbr.rel (%p42) target = $region25
    $region24: #{tpu_custom_call.1} parent=1 // pred_region
      %vm45 = vcmask 130048
      %46 = vst.msk [vmem:[#allocation2] sm:$0xff] %vm45, 0.0
    $region25: #{tpu_custom_call.1} parent=1 // pred_fallthru
      _
    %v47 = vld [vmem:[#allocation2] sm:$0xff]
    %v48 = vld [vmem:[#allocation3] sm:$0xff]
    %v49 = vld [vmem:[#allocation6] sm:$0xff]
    %v50 = vld [vmem:[#allocation6 + $0x8] sm:$0xff]
    %vm51 = vcmask 261120
    %v53 = vsel %vm51, %v48, 0
    %v56 = vsel %vm51, %v49, 0
    %v59 = vsel %vm51, %v50, 0
    %61 = vmatprep.subr.mxu0 0.0
    %62 = vmatpush1.xpose.msra.mxu0 0.0
    %63 = vmatprep.subr.mxu0 0.0
    %64 = vmatpush1.xpose.msra.mxu0 0.0
    %65 = vmatprep.subr.mxu0 0.0
    %66 = vmatpush1.xpose.msra.mxu0 0.0
    %67 = vmatprep.subr.mxu0 0.0
    %68 = vmatpush1.xpose.msra.mxu0 0.0
    %69 = vmatprep.subr.mxu0 0.0
    %70 = vmatpush1.xpose.msra.mxu0 0.0
    %71 = vmatprep.subr.mxu0 0.0
    %72 = vmatpush1.xpose.msra.mxu0 0.0
    %73 = vmatprep.subr.mxu0 0.0
    %74 = vmatpush1.xpose.msra.mxu0 0.0
    %75 = vmatprep.subr.mxu0 0.0
    %76 = vmatpush1.xpose.msra.mxu0 0.0
    %77 = vmatprep.subr.mxu0 0.0
    %78 = vmatpush1.xpose.msra.mxu0 0.0
    %79 = vmatprep.subr.mxu0 0.0
    %80 = vmatpush1.xpose.msra.mxu0 0.0
    %81 = vmatprep.subr.mxu0 0.0
    %82 = vmatpush1.xpose.msra.mxu0 0.0
    %83 = vmatprep.subr.mxu0 0.0
    %84 = vmatpush1.xpose.msra.mxu0 0.0
    %85 = vmatprep.subr.mxu0 0.0
    %86 = vmatpush1.xpose.msra.mxu0 0.0
    %87 = vmatprep.subr.mxu0 0.0
    %88 = vmatpush1.xpose.msra.mxu0 0.0
    %89 = vmatprep.subr.mxu0 0.0
    %90 = vmatpush1.xpose.msra.mxu0 %v59
    %91 = vmatprep.subr.mxu0 0.0
    %92 = vmatpush1.xpose.msra.mxu0 %v56
    %93 = vmatprep.subr.mxu0 0.0
    %94 = vmatpush2.xpose.msra.mxu0 0.0
    %95 = vmatprep.subr.mxu0 0.0
    %96 = vmatpush2.xpose.msra.mxu0 0.0
    %97 = vmatprep.subr.mxu0 0.0
    %98 = vmatpush2.xpose.msra.mxu0 0.0
    %99 = vmatprep.subr.mxu0 0.0
    %100 = vmatpush2.xpose.msra.mxu0 0.0
    %101 = vmatprep.subr.mxu0 0.0
    %102 = vmatpush2.xpose.msra.mxu0 0.0
    %103 = vmatprep.subr.mxu0 0.0
    %104 = vmatpush2.xpose.msra.mxu0 0.0
    %105 = vmatprep.subr.mxu0 0.0
    %106 = vmatpush2.xpose.msra.mxu0 0.0
    %107 = vmatprep.subr.mxu0 0.0
    %108 = vmatpush2.xpose.msra.mxu0 0.0
    %109 = vmatprep.subr.mxu0 0.0
    %110 = vmatpush2.xpose.msra.mxu0 0.0
    %111 = vmatprep.subr.mxu0 0.0
    %112 = vmatpush2.xpose.msra.mxu0 0.0
    %113 = vmatprep.subr.mxu0 0.0
    %114 = vmatpush2.xpose.msra.mxu0 0.0
    %115 = vmatprep.subr.mxu0 0.0
    %116 = vmatpush2.xpose.msra.mxu0 0.0
    %117 = vmatprep.subr.mxu0 0.0
    %118 = vmatpush2.xpose.msra.mxu0 0.0
    %119 = vmatprep.subr.mxu0 0.0
    %120 = vmatpush2.xpose.msra.mxu0 0.0
    %121 = vmatprep.subr.mxu0 0.0
    %122 = vmatpush2.xpose.msra.mxu0 0.0
    %123 = vmatprep.subr.mxu0 0.0
    %124 = vmatpush2.xpose.msra.mxu0 0.0
    %125 = vmatprep.mubr.f32.mxu0 0.0
    %126 = vmatmul.mubr.f32.gmra.mxu0 %v53
    %v127 = vpop.f32.mrf.mxu0
    %v128 = vadd.f32 0.0, %v127
    %v129 = vpop.f32.mrf.mxu0
    %130 = vdwg.mxu0
    %v131 = vadd.f32 %v47, %v128
    %vm132 = vcmask 130048
    %133 = vst.msk [vmem:[#allocation2] sm:$0xff] %vm132, %v131
    // Predicated region
    $region26: #{tpu_custom_call.1} parent=1 // pred_check
      %p134 = pneg %p41
    $region27: #{tpu_custom_call.1} parent=1 // pred_check_branch
      %136 = sbr.rel (%p134) target = $region29
    $region28: #{tpu_custom_call.1} parent=1 // pred_region
      %v137 = vld [vmem:[#allocation2] sm:$0xff]
      %v138 = vld [vmem:[%s2] sm:$0x1]
      %v140 = vlaneseq
      %v141 = vshrl.u32 %v140, 7
      %v142 = vsub.s32 0, %v141
      %v143 = vrot.slane %v138, %v142
      %v145 = vadd.f32 %v137, %v143
      %146 = vst.msk [vmem:[#allocation8] sm:$0xff] %vm132, %v145
    $region29: #{tpu_custom_call.1} parent=1 // pred_fallthru
      _
    // Predicated region
    $region30: #{tpu_custom_call.1} parent=1 // pred_check
      _
    $region31: #{tpu_custom_call.1} parent=1 // pred_check_branch
      %148 = sbr.rel (0) target = $region33
    $region32: #{tpu_custom_call.1} parent=1 // pred_region
      %s150 = ssub.s32 128, 128
      %151 = vsyncadd [#allocation5], %s150
      %s153 = sshll.u32 [#allocation8], 4
      %s154 = int_to_ptr.vmem [resolvable:$true] %s153
      %156 = dma.vmem_to_hbm [thread:$0]  %s154, 128, %s3, [#allocation5]
    $region33: #{tpu_custom_call.1} parent=1 // pred_fallthru
      _
    // Predicated region
    $region34: #{tpu_custom_call.1} parent=1 // pred_check
      _
    $region35: #{tpu_custom_call.1} parent=1 // pred_check_branch
      %158 = sbr.rel (0) target = $region37
    $region36: #{tpu_custom_call.1} parent=1 // pred_region
      %159 = dma.done [#allocation5], 128
    $region37: #{tpu_custom_call.1} parent=1 // pred_fallthru
      _
    %160 = vsyncpa [#allocation4], 1
    %161 = vsyncpa [#allocation7], 1
    %162 = vsyncpa [#allocation5], 1

</llo_original>
